<compile_context>
chip_gen: v7x
topology: tpu7x:2x2x1
jax: 0.10.0
libtpu: 0.0.40
codegen_flags: <defaults>
</compile_context>

<pallas_src>
import math

import jax
import jax.numpy as jnp
from jax.experimental import pallas as pl
from jax.experimental.pallas import tpu as pltpu


def make_pe_table(max_len, d_model, dtype=jnp.float32):
    """Sin/cos table identical to the PyTorch __init__ (2-D (max_len, d_model) view)."""
    position = jnp.arange(max_len, dtype=jnp.float32)[:, None]
    div_term = jnp.exp(
        jnp.arange(0, d_model, 2, dtype=jnp.float32) * (-math.log(10000.0) / d_model))
    pe = jnp.zeros((max_len, d_model), dtype=jnp.float32)
    pe = pe.at[:, 0::2].set(jnp.sin(position * div_term))
    pe = pe.at[:, 1::2].set(jnp.cos(position * div_term))
    return pe.astype(dtype)


def _pe_kernel(scale_ref, x_ref, pe_ref, o_ref):
    # scale_ref: (1,) f32 in SMEM
    # x_ref/o_ref: (tS, B, D) tile in native (seq, batch, d_model) layout
    # pe_ref:      (tS, D) positional-table rows for this sequence tile
    # Only the small (tS, D) scale*pe product goes through f32; the big add
    # runs in x.dtype (bf16-native on v6e/v7x, exact for f32).
    pe = (scale_ref[0] * pe_ref[...].astype(jnp.float32)).astype(x_ref.dtype)
    o_ref[...] = x_ref[...] + pe[:, None, :]


def _round_up(x, m):
    return ((x + m - 1) // m) * m


def _vmem_capacity_bytes():
    try:
        return int(pltpu.get_tpu_info().vmem_capacity_bytes)
    except Exception:
        return 64 * 1024 * 1024  # conservative fallback (v7x per-TC VMEM)


def _choose_seq_tile(S, row_bytes, vmem_budget, align):
    """Sequence-tile size (multiple of `align`, the sublane pack of the dtype).

    Targets `vmem_budget` of total double-buffered VMEM (a few MiB per block is
    enough to sit at HBM roofline), then prefers >= 8 grid steps and an even
    step count so pipeline fill/drain is hidden and v7x's two TensorCores get
    balanced work (neutral on single-TC v5e/v6e).
    """
    s_pad = _round_up(S, align)
    ts = max(align, (vmem_budget // max(row_bytes, 1)) // align * align)
    ts = min(ts, s_pad)

    max_steps = s_pad // align
    want_steps = min(8, max_steps)
    ts = min(ts, max(align, _round_up(pl.cdiv(S, want_steps), align)))

    steps = pl.cdiv(S, ts)
    if steps > 1 and steps % 2 == 1:
        for cand in (ts - align, ts + align):
            if align <= cand <= s_pad and pl.cdiv(S, cand) % 2 == 0:
                ts = cand
                break
    return ts


def positional_encoding_forward(x, scale, pe_table, *, donate_x=False):
    """x: (S, B, D) native (seq, batch, d_model). scale: f32 shape (1,).
    pe_table: (max_len, D) (the 2-D view of the PyTorch (max_len, 1, D) buffer).

    Returns (S, B, D) in x.dtype.  Eval-mode dropout == identity.
    """
    S, B, D = x.shape
    max_len, d_pe = pe_table.shape
    assert max_len >= S, "pe table shorter than sequence length"
    assert d_pe == D, "pe table feature-dim mismatch"
    # Fast path (unmasked lane-dense stores) needs D % 128 == 0; other D still
    # works but uses masked partial stores.

    scale = jnp.asarray(scale, dtype=jnp.float32).reshape((1,))

    # Low-precision x: stream pe in the same dtype (halves pe HBM reads;
    # precision loss on bounded sin/cos values is benign).
    if jnp.dtype(x.dtype).itemsize < 4 and pe_table.dtype != x.dtype:
        pe_table = pe_table.astype(x.dtype)

    x_item = jnp.dtype(x.dtype).itemsize
    pe_item = jnp.dtype(pe_table.dtype).itemsize
    pack = max(1, 32 // x_item)          # sublane pack: 8 f32, 16 bf16, 32 int8
    b_pad = _round_up(B, pack)           # B slab is sublane-padded in VMEM
    d_pad = _round_up(D, 128)            # lane padding of the last dim

    vmem_cap = _vmem_capacity_bytes()
    vmem_budget = min(vmem_cap // 4, 16 * 1024 * 1024)

    # Per sequence row, double-buffered: 2 x (x block + out block) + 2 x pe row.
    row_bytes = 2 * 2 * b_pad * d_pad * x_item + 2 * d_pad * pe_item
    ts = _choose_seq_tile(S, row_bytes, vmem_budget, pack)
    grid = (pl.cdiv(S, ts),)

    needed = ts * row_bytes
    vmem_limit = int(min(vmem_cap // 2, max(2 * needed, 16 * 1024 * 1024)))

    return pl.pallas_call(
        _pe_kernel,
        out_shape=jax.ShapeDtypeStruct((S, B, D), x.dtype),
        grid_spec=pltpu.PrefetchScalarGridSpec(
            num_scalar_prefetch=0,
            grid=grid,
            in_specs=[
                pl.BlockSpec(memory_space=pltpu.MemorySpace.SMEM),  # scale
                pl.BlockSpec((ts, B, D), lambda s: (s, 0, 0)),      # x
                pl.BlockSpec((ts, D), lambda s: (s, 0)),            # pe rows
            ],
            out_specs=pl.BlockSpec((ts, B, D), lambda s: (s, 0, 0)),
        ),
        compiler_params=pltpu.CompilerParams(
            dimension_semantics=("parallel",),
            vmem_limit_bytes=vmem_limit,
        ),
        input_output_aliases=({1: 0} if donate_x else {}),
    )(scale, x, pe_table)


if __name__ == "__main__":
    key = jax.random.PRNGKey(0)
    k1, k2 = jax.random.split(key)

    # Test 1: small shapes consistent with the module's forward (seq, batch, d_model).
    S, B, D = 8, 2, 32
    MAX_LEN = 64
    x = jax.random.normal(k1, (S, B, D), dtype=jnp.float32)
    scale = jnp.ones((1,), dtype=jnp.float32)        # nn.Parameter(torch.ones(1))
    pe_table = make_pe_table(MAX_LEN, D)              # registered buffer (2-D view)

    out = jax.block_until_ready(positional_encoding_forward(x, scale, pe_table))
    ref = x + scale[0] * pe_table[:S][:, None, :]
    assert out.shape == (S, B, D) and out.dtype == x.dtype
    assert jnp.allclose(out, ref, atol=1e-6, rtol=1e-6)

    # Test 2: batch >= sublane pack, D a multiple of 128 (lane-dense fast path).
    S2, B2, D2 = 16, 8, 128
    x2 = jax.random.normal(k2, (S2, B2, D2), dtype=jnp.float32)
    pe_table2 = make_pe_table(MAX_LEN, D2)
    out2 = jax.block_until_ready(positional_encoding_forward(x2, scale, pe_table2))
    ref2 = x2 + scale[0] * pe_table2[:S2][:, None, :]
    assert jnp.allclose(out2, ref2, atol=1e-6, rtol=1e-6)

    # Test 3: bf16 x -> pe streamed in bf16, add in bf16, output stays bf16.
    x3 = x2.astype(jnp.bfloat16)
    out3 = jax.block_until_ready(positional_encoding_forward(x3, scale, pe_table2))
    pe_bf16 = pe_table2.astype(jnp.bfloat16)
    ref3 = x3 + (scale[0] * pe_bf16.astype(jnp.float32)).astype(jnp.bfloat16)[:S2][:, None, :]
    assert out3.dtype == jnp.bfloat16
    assert jnp.allclose(out3.astype(jnp.float32), ref3.astype(jnp.float32),
                        atol=2e-2, rtol=2e-2)

    print("KERNEL_OK")
</pallas_src>

<mosaic_0001>
module attributes {stable_mosaic.version = 11 : i64} {
  func.func @_pe_kernel(%arg0: i32, %arg1: memref<1xf32, #tpu.memory_space<smem>>, %arg2: memref<8x2x32xf32, #tpu.memory_space<vmem>>, %arg3: memref<8x32xf32, #tpu.memory_space<vmem>>, %arg4: memref<8x2x32xf32, #tpu.memory_space<vmem>>) attributes {dimension_semantics = [#tpu.dimension_semantics<parallel>], iteration_bounds = array<i64: 1>, scalar_prefetch = 0 : i64, scratch_operands = 0 : i64, tpu.core_type = #tpu.core_type<tc>, window_params = [{transform_indices = @transform_0, window_bounds = array<i64: 1>}, {transform_indices = @transform_1, window_bounds = array<i64: 8, 2, 32>}, {transform_indices = @transform_2, window_bounds = array<i64: 8, 32>}, {transform_indices = @transform_3, window_bounds = array<i64: 8, 2, 32>}]} {
    %c0 = arith.constant 0 : index
    %0 = memref.load %arg1[%c0] : memref<1xf32, #tpu.memory_space<smem>>
    %c0_0 = arith.constant 0 : index
    %c0_1 = arith.constant 0 : index
    %1 = vector.load %arg3[%c0_0, %c0_1] : memref<8x32xf32, #tpu.memory_space<vmem>>, vector<8x32xf32>
    %2 = vector.broadcast %0 : f32 to vector<8x32xf32>
    %3 = arith.mulf %2, %1 : vector<8x32xf32>
    %c0_2 = arith.constant 0 : index
    %c0_3 = arith.constant 0 : index
    %c0_4 = arith.constant 0 : index
    %4 = vector.load %arg2[%c0_2, %c0_3, %c0_4] : memref<8x2x32xf32, #tpu.memory_space<vmem>>, vector<8x2x32xf32>
    %5 = vector.shape_cast %3 : vector<8x32xf32> to vector<8x1x32xf32>
    %6 = vector.broadcast %5 : vector<8x1x32xf32> to vector<8x2x32xf32>
    %7 = arith.addf %4, %6 : vector<8x2x32xf32>
    %c0_5 = arith.constant 0 : index
    %c0_6 = arith.constant 0 : index
    %c0_7 = arith.constant 0 : index
    %8 = vector.load %arg4[%c0_5, %c0_6, %c0_7] : memref<8x2x32xf32, #tpu.memory_space<vmem>>, vector<8x2x32xf32>
    tpu.vector_store %arg4[%c0_5, %c0_6, %c0_7], %7 {strides = array<i32>} : memref<8x2x32xf32, #tpu.memory_space<vmem>>, vector<8x2x32xf32>,
    return
  }
  func.func @transform_0(%arg0: i32) -> i32 {
    %c0_i32 = arith.constant 0 : i32
    %c0_i32_0 = arith.constant 0 : i32
    return %c0_i32 : i32
  }
  func.func @transform_1(%arg0: i32) -> (i32, i32, i32) {
    %c0_i32 = arith.constant 0 : i32
    %c0_i32_0 = arith.constant 0 : i32
    %c0_i32_1 = arith.constant 0 : i32
    return %arg0, %c0_i32, %c0_i32_0 : i32, i32, i32
  }
  func.func @transform_2(%arg0: i32) -> (i32, i32) {
    %c0_i32 = arith.constant 0 : i32
    %c0_i32_0 = arith.constant 0 : i32
    return %arg0, %c0_i32 : i32, i32
  }
  func.func @transform_3(%arg0: i32) -> (i32, i32, i32) {
    %c0_i32 = arith.constant 0 : i32
    %c0_i32_0 = arith.constant 0 : i32
    %c0_i32_1 = arith.constant 0 : i32
    return %arg0, %c0_i32, %c0_i32_0 : i32, i32, i32
  }
}

</mosaic_0001>

<llo_original>
// kernel: tpu_custom_call.1
$region0: #{tpu_custom_call.1}
  #allocation0 [shape = 'u32[]', space=smem, size = 0x4, offset = 0x4, fixed_abs, tag = 'smem constant byte address 0x4 - core index']
  #allocation1 [shape = 'u32[144,128]{1,0:T(1,128)}', space=vmem, size = 0x12000, scoped, tag = 'internal scratch']
  #allocation2 [shape = 'f32[1]{0:T(128)S(6)}', space=smem, size = 0x200, scoped, tag = 'scoped memory for tpu_custom_call.1']
  %s0 = inlined_call_operand.<no memory space> [shape: f32[1], index: 0, kind: input, shape index: {}]
  %s1 = inlined_call_operand.vmem [shape: f32[8,2,32], index: 1, kind: input, shape index: {}]
  %s2 = inlined_call_operand.vmem [shape: f32[64,32], index: 2, kind: input, shape index: {}]
  %s3 = inlined_call_operand.hbm [shape: f32[8,2,32], index: 3, kind: output, shape index: {}]
  %s4 = sld [smem:[#allocation0]]
  $region22: #{tpu_custom_call.1} parent=0
    _
  %s6 = ssub.s32 1, %s4
  %s7 = scalar_select 0, %s6, %s4
  %8 = sst [smem:[#allocation2]] %s0
  $region1: #{tpu_custom_call.1} parent=0
    #allocation3 [shape = 'u8[8192]{0}', space=vmem, size = 0x2000, scoped, tag = 'output window, operand 0, single buffered']
    #allocation4 [shape = 's32[1]{0}', space=sflag, size = 0x4, scoped, tag = 'scoped memory for tpu_custom_call.1']
    %9 = vsyncpa [#allocation4], 0
    // Predicated region
    $region2: #{tpu_custom_call.1} parent=1 // pred_check
      _
    $region3: #{tpu_custom_call.1} parent=1 // pred_check_branch
      %11 = sbr.rel (0) target = $region5
    $region4: #{tpu_custom_call.1} parent=1 // pred_region
      _
    $region5: #{tpu_custom_call.1} parent=1 // pred_fallthru
      _
    // Predicated region
    $region6: #{tpu_custom_call.1} parent=1 // pred_check
      _
    $region7: #{tpu_custom_call.1} parent=1 // pred_check_branch
      %13 = sbr.rel (0) target = $region9
    $region8: #{tpu_custom_call.1} parent=1 // pred_region
      _
    $region9: #{tpu_custom_call.1} parent=1 // pred_fallthru
      _
    // Predicated region
    $region10: #{tpu_custom_call.1} parent=1 // pred_check
      _
    $region11: #{tpu_custom_call.1} parent=1 // pred_check_branch
      %15 = sbr.rel (0) target = $region13
    $region12: #{tpu_custom_call.1} parent=1 // pred_region
      _
    $region13: #{tpu_custom_call.1} parent=1 // pred_fallthru
      _
    %s16 = sld [smem:[#allocation2]]
    %v17 = vld [vmem:[%s2] sm:$0xff]
    %v18 = vstv %s16
    %v19 = vmul.f32 %v18, %v17
    %v20 = vld [vmem:[%s1] sm:$0x3]
    %v21 = vld [vmem:[%s1 + $0x2] sm:$0x3]
    %v22 = vld [vmem:[%s1 + $0x4] sm:$0x3]
    %v23 = vld [vmem:[%s1 + $0x6] sm:$0x3]
    %v24 = vld [vmem:[%s1 + $0x8] sm:$0x3]
    %v25 = vld [vmem:[%s1 + $0xa] sm:$0x3]
    %v26 = vld [vmem:[%s1 + $0xc] sm:$0x3]
    %v27 = vld [vmem:[%s1 + $0xe] sm:$0x3]
    %v29 = vcombine.high %v19, %v19
    %v31 = vunpack.c.l.s4 1966171168
    %v32 = vunpack.c.0.s8 %v31
    %v33 = vlaneseq
    %v34 = vshrl.u32 %v33, 7
    %v35 = vsub.s32 %v32, %v34
    %v36 = vrot.slane %v19, %v35
    %v38 = vunpack.c.l.s4 1966171168
    %v39 = vunpack.c.0.s8 %v38
    %v40 = vlaneseq
    %v41 = vshrl.u32 %v40, 7
    %v42 = vsub.s32 %v39, %v41
    %v43 = vrot.slane %v29, %v42
    %v44 = vcombine.high %v36, %v36
    %v45 = vcombine.high %v43, %v43
    %v47 = vunpack.c.l.s4 1966171168
    %v48 = vunpack.c.0.s8 %v47
    %v49 = vlaneseq
    %v50 = vshrl.u32 %v49, 7
    %v51 = vsub.s32 %v48, %v50
    %v52 = vrot.slane %v36, %v51
    %v54 = vunpack.c.l.s4 1966171168
    %v55 = vunpack.c.0.s8 %v54
    %v56 = vlaneseq
    %v57 = vshrl.u32 %v56, 7
    %v58 = vsub.s32 %v55, %v57
    %v59 = vrot.slane %v43, %v58
    %v61 = vunpack.c.l.s4 1966171168
    %v62 = vunpack.c.0.s8 %v61
    %v63 = vlaneseq
    %v64 = vshrl.u32 %v63, 7
    %v65 = vsub.s32 %v62, %v64
    %v66 = vrot.slane %v44, %v65
    %v68 = vunpack.c.l.s4 1966171168
    %v69 = vunpack.c.0.s8 %v68
    %v70 = vlaneseq
    %v71 = vshrl.u32 %v70, 7
    %v72 = vsub.s32 %v69, %v71
    %v73 = vrot.slane %v45, %v72
    %v74 = vcombine.high %v52, %v52
    %v75 = vcombine.high %v59, %v59
    %v76 = vcombine.high %v66, %v66
    %v77 = vcombine.high %v73, %v73
    %v78 = vlaneseq
    %v79 = vshrl.u32 %v78, 7
    %v80 = vsub.s32 0, %v79
    %v81 = vrot.slane %v52, %v80
    %v82 = vlaneseq
    %v83 = vshrl.u32 %v82, 7
    %v84 = vsub.s32 0, %v83
    %v85 = vrot.slane %v66, %v84
    %v86 = vlaneseq
    %v87 = vshrl.u32 %v86, 7
    %v88 = vsub.s32 0, %v87
    %v89 = vrot.slane %v74, %v88
    %v90 = vlaneseq
    %v91 = vshrl.u32 %v90, 7
    %v92 = vsub.s32 0, %v91
    %v93 = vrot.slane %v76, %v92
    %v94 = vlaneseq
    %v95 = vshrl.u32 %v94, 7
    %v96 = vsub.s32 0, %v95
    %v97 = vrot.slane %v59, %v96
    %v98 = vlaneseq
    %v99 = vshrl.u32 %v98, 7
    %v100 = vsub.s32 0, %v99
    %v101 = vrot.slane %v73, %v100
    %v102 = vlaneseq
    %v103 = vshrl.u32 %v102, 7
    %v104 = vsub.s32 0, %v103
    %v105 = vrot.slane %v75, %v104
    %v106 = vlaneseq
    %v107 = vshrl.u32 %v106, 7
    %v108 = vsub.s32 0, %v107
    %v109 = vrot.slane %v77, %v108
    %v118 = vadd.f32 %v20, %v81
    %v119 = vadd.f32 %v21, %v85
    %v120 = vadd.f32 %v22, %v89
    %v121 = vadd.f32 %v23, %v93
    %v122 = vadd.f32 %v24, %v97
    %v123 = vadd.f32 %v25, %v101
    %v124 = vadd.f32 %v26, %v105
    %v125 = vadd.f32 %v27, %v109
    %vm126 = vcmask 254976
    %127 = vst.msk [vmem:[#allocation3] sm:$0x3] %vm126, %v118
    %128 = vst.msk [vmem:[#allocation3 + $0x2] sm:$0x3] %vm126, %v119
    %129 = vst.msk [vmem:[#allocation3 + $0x4] sm:$0x3] %vm126, %v120
    %130 = vst.msk [vmem:[#allocation3 + $0x6] sm:$0x3] %vm126, %v121
    %131 = vst.msk [vmem:[#allocation3 + $0x8] sm:$0x3] %vm126, %v122
    %132 = vst.msk [vmem:[#allocation3 + $0xa] sm:$0x3] %vm126, %v123
    %133 = vst.msk [vmem:[#allocation3 + $0xc] sm:$0x3] %vm126, %v124
    %134 = vst.msk [vmem:[#allocation3 + $0xe] sm:$0x3] %vm126, %v125
    // Predicated region
    $region14: #{tpu_custom_call.1} parent=1 // pred_check
      _
    $region15: #{tpu_custom_call.1} parent=1 // pred_check_branch
      %136 = sbr.rel (0) target = $region17
    $region16: #{tpu_custom_call.1} parent=1 // pred_region
      %s138 = ssub.s32 256, 256
      %139 = vsyncadd [#allocation4], %s138
      %s140 = sshll.u32 [#allocation3], 4
      %s141 = int_to_ptr.vmem [resolvable:$true] %s140
      %146 = dma.vmem_to_hbm [thread:$0]  %s141, 256, %s3, [#allocation4], 32, 32, 2
    $region17: #{tpu_custom_call.1} parent=1 // pred_fallthru
      _
    // Predicated region
    $region18: #{tpu_custom_call.1} parent=1 // pred_check
      _
    $region19: #{tpu_custom_call.1} parent=1 // pred_check_branch
      %148 = sbr.rel (0) target = $region21
    $region20: #{tpu_custom_call.1} parent=1 // pred_region
      %149 = dma.done [#allocation4], 256
    $region21: #{tpu_custom_call.1} parent=1 // pred_fallthru
      _
    %150 = vsyncpa [#allocation4], 1

</llo_original>
